<compile_context>
chip_gen: v7x
topology: tpu7x:2x2x1
jax: 0.10.0
libtpu: 0.0.40
codegen_flags: <defaults>
</compile_context>

<pallas_src>
import functools

import numpy as np
import jax
import jax.numpy as jnp
from jax import lax
from jax.experimental import pallas as pl
from jax.experimental.pallas import tpu as pltpu

TAU = 0.95
SUBLANE = 8
LANE = 128


def _round_up(a, b):
    return (a + b - 1) // b * b


def color_loss_kernel(x_ref, emb_ref, idx_ref, out_ref, *,
                      n_valid, k_valid, tau, tile_n, padded):
    i = pl.program_id(0)

    @pl.when(i == 0)
    def _init():
        out_ref[...] = jnp.zeros_like(out_ref)

    x = x_ref[...].astype(jnp.float32)        # (T, D)  raw inputs
    emb = emb_ref[...].astype(jnp.float32)    # (Kp, D) color table; rows >= k_valid are exact zeros
    idx = idx_ref[...]                        # (1, T)  int32 gt color index per row

    t, d = x.shape
    kp = emb.shape[0]
    inv_tau = 1.0 / tau

    # Row sum-of-squares directly in lane orientation (1, T) via an MXU
    # ones-vector matmul, so all downstream per-row work is lane-dense.
    ones_row = jnp.ones((1, d), jnp.float32)
    ssq = lax.dot_general(ones_row, x * x, (((1,), (1,)), ((), ())),
                          preferred_element_type=jnp.float32)        # (1, T)
    # Guarded rsqrt (EUP). The guard only matters for zero-padded rows; a truly
    # zero-norm input row would also blow up in the torch reference.
    inv_norm = lax.rsqrt(jnp.maximum(ssq, 1e-30))                     # (1, T)

    # K on sublanes, N on lanes: raw[k, i] = e_k . x_i (unnormalized dots).
    raw = lax.dot_general(emb, x, (((1,), (1,)), ((), ())),
                          preferred_element_type=jnp.float32)         # (Kp, T)
    # Normalization and temperature folded into one per-column scale.
    sim = raw * (inv_norm * inv_tau)                                   # (Kp, T)

    # Ground-truth selection without materializing an f32 one-hot.
    krow = lax.broadcasted_iota(jnp.int32, (kp, t), 0)
    s_gt = jnp.sum(jnp.where(krow == idx, sim, 0.0),
                   axis=0, keepdims=True)                              # (1, T)

    # Padded emb rows are exactly zero -> exp(0) == 1 each; subtract the count.
    denom = jnp.sum(jnp.exp(sim), axis=0, keepdims=True) - float(kp - k_valid)

    # Log-domain infoNCE: -log(exp(s_gt)/denom) = log(denom) - s_gt.
    contras = jnp.log(denom) - s_gt                                    # (1, T)

    # Closed-form MSE term (requires unit-norm embedding rows):
    #   sum||x - e_gt||^2 = sum||x||^2 + N_valid - 2*tau*sum(s_gt * ||x||)
    norm = ssq * inv_norm                                              # (1, T) = ||x||, 0 on pad rows
    mse_col = ssq - (2.0 * tau) * s_gt * norm                          # (1, T)

    if padded:
        col = lax.broadcasted_iota(jnp.int32, (1, t), 1) + i * tile_n
        valid = col < n_valid
        contras = jnp.where(valid, contras, 0.0)
        nv = jnp.sum(valid.astype(jnp.float32), keepdims=True)         # (1, 1)
    else:
        nv = float(tile_n)

    # total = mean(contras) + MSE(x, e_gt) * N = sum(contras)/N + sum||x-e_gt||^2 / D
    per_col = contras * (1.0 / n_valid) + mse_col * (1.0 / d)
    out_ref[...] += jnp.sum(per_col, keepdims=True) + nv * (1.0 / d)


def pad_color_table(all_embeddings):
    """Pad the (K, D) unit-norm color table to a sublane multiple with exact zero
    rows. Call ONCE per table (outside the per-call loss wrapper)."""
    k, d = all_embeddings.shape
    kp = _round_up(k, SUBLANE)                 # 11 -> 16 sublanes, not 128 lanes
    emb_pad = jnp.zeros((kp, d), jnp.float32).at[:k, :].set(
        all_embeddings.astype(jnp.float32))
    return emb_pad, k


def color_loss(x, name_indices, emb_pad, k_valid, *, tau=TAU, tile_n=2048):
    """x: (N, D) f32; name_indices: (N,) int gt color index; emb_pad: (Kp, D)
    zero-padded unit-norm color table from pad_color_table()."""
    n, d = x.shape
    kp = emb_pad.shape[0]

    if n <= tile_n:
        tile = _round_up(n, SUBLANE)           # single tile, full-array blocks
    else:
        tile = _round_up(tile_n, LANE)         # multi-tile: lane-aligned idx blocks
    n_pad = _round_up(n, tile)
    padded = n_pad != n

    x_in = x
    idx_in = name_indices.astype(jnp.int32)
    if padded:
        x_in = jnp.zeros((n_pad, d), x.dtype).at[:n, :].set(x)
        idx_in = jnp.zeros((n_pad,), jnp.int32).at[:n].set(idx_in)
    idx_in = idx_in.reshape(1, n_pad)

    kernel = functools.partial(color_loss_kernel, n_valid=n, k_valid=k_valid,
                               tau=tau, tile_n=tile, padded=padded)
    out = pl.pallas_call(
        kernel,
        out_shape=jax.ShapeDtypeStruct((1, 1), jnp.float32),
        grid=(n_pad // tile,),
        in_specs=[
            pl.BlockSpec((tile, d), lambda i: (i, 0)),     # x rows stream
            pl.BlockSpec((kp, d), lambda i: (0, 0)),       # color table resident
            pl.BlockSpec((1, tile), lambda i: (0, i)),     # gt indices stream
        ],
        out_specs=pl.BlockSpec((1, 1), lambda i: (0, 0)),  # resident scalar accumulator
        compiler_params=pltpu.CompilerParams(
            dimension_semantics=("arbitrary",)),
    )(x_in, emb_pad, idx_in)
    return out[0, 0]


def _reference_color_loss(x, idx, all_embeddings, tau=TAU):
    """Pure-JAX mirror of the torch forward."""
    n = x.shape[0]
    xn = x / jnp.linalg.norm(x, axis=-1, keepdims=True)
    emb_gt = all_embeddings[idx]
    sim = xn @ all_embeddings.T
    denom = jnp.sum(jnp.exp(sim / tau), axis=1)
    numer = jnp.exp(jnp.sum(xn * emb_gt, axis=-1) / tau)
    contras = -jnp.log(numer / denom)
    mse = jnp.mean((x - emb_gt) ** 2) * n
    return contras.mean() + mse


if __name__ == "__main__":
    # Synthetic deterministic "basic_color_embeddings.csv": K=11 basic colors,
    # embedding dim D=32. Rows L2-normalized, matching the module __init__.
    N, D, K = 8, 32, 11
    color_names = ("red", "green", "blue", "yellow", "orange", "purple",
                   "pink", "brown", "black", "white", "gray")

    key = jax.random.PRNGKey(0)
    k_emb, k_x, k_names, k_x2, k_n2 = jax.random.split(key, 5)

    raw_tbl = jax.random.normal(k_emb, (K, D), dtype=jnp.float32)
    all_embeddings = raw_tbl / jnp.linalg.norm(raw_tbl, axis=-1, keepdims=True)
    emb_pad, k_valid = pad_color_table(all_embeddings)    # built once per table

    x = jax.random.normal(k_x, (N, D), dtype=jnp.float32)

    # x_names: tuple of color-name strings (as in the torch forward signature),
    # converted to integer indices on the host (string lookup is host-side only).
    rand_idx = np.array(jax.random.randint(k_names, (N,), 0, K))
    x_names = tuple(color_names[int(i)] for i in rand_idx)
    name_to_idx = {nm: i for i, nm in enumerate(color_names)}
    idx = jnp.array([name_to_idx[nm] for nm in x_names], dtype=jnp.int32)

    total = jax.block_until_ready(color_loss(x, idx, emb_pad, k_valid))
    ref = _reference_color_loss(x, idx, all_embeddings)
    assert jnp.allclose(total, ref, rtol=1e-4, atol=1e-4), (float(total), float(ref))

    # Also exercise the multi-tile / padded-rows grid path.
    N2 = 200
    x2 = jax.random.normal(k_x2, (N2, D), dtype=jnp.float32)
    idx2 = jax.random.randint(k_n2, (N2,), 0, K).astype(jnp.int32)
    total2 = jax.block_until_ready(color_loss(x2, idx2, emb_pad, k_valid, tile_n=128))
    ref2 = _reference_color_loss(x2, idx2, all_embeddings)
    assert jnp.allclose(total2, ref2, rtol=1e-4, atol=1e-4), (float(total2), float(ref2))

    print("KERNEL_OK")
</pallas_src>

<mosaic_0001>
module attributes {stable_mosaic.version = 11 : i64} {
  func.func @color_loss_kernel(%arg0: i32, %arg1: memref<8x32xf32, #tpu.memory_space<vmem>>, %arg2: memref<16x32xf32, #tpu.memory_space<vmem>>, %arg3: memref<1x8xi32, #tpu.memory_space<vmem>>, %arg4: memref<1x1xf32, #tpu.memory_space<vmem>>) attributes {dimension_semantics = [#tpu.dimension_semantics<arbitrary>], iteration_bounds = array<i64: 1>, scalar_prefetch = 0 : i64, scratch_operands = 0 : i64, tpu.core_type = #tpu.core_type<tc>, window_params = [{transform_indices = @transform_0, window_bounds = array<i64: 8, 32>}, {pipeline_mode = #tpu.pipeline_mode<synchronous>, transform_indices = @transform_1, window_bounds = array<i64: 16, 32>}, {transform_indices = @transform_2, window_bounds = array<i64: 1, 8>}, {pipeline_mode = #tpu.pipeline_mode<synchronous>, transform_indices = @transform_3, window_bounds = array<i64: 1, 1>}]} {
    %c0_i32 = arith.constant 0 : i32
    %0 = arith.cmpi eq, %arg0, %c0_i32 : i32
    %1 = arith.extui %0 : i1 to i32
    %c0_i32_0 = arith.constant 0 : i32
    %2 = arith.cmpi ne, %1, %c0_i32_0 : i32
    scf.if %2 {
      %cst_23 = arith.constant 0.000000e+00 : f32
      %51 = vector.broadcast %cst_23 : f32 to vector<1x1xf32>
      %c0_24 = arith.constant 0 : index
      %c0_25 = arith.constant 0 : index
      %52 = vector.load %arg4[%c0_24, %c0_25] : memref<1x1xf32, #tpu.memory_space<vmem>>, vector<1x1xf32>
      tpu.vector_store %arg4[%c0_24, %c0_25], %51 {strides = array<i32>} : memref<1x1xf32, #tpu.memory_space<vmem>>, vector<1x1xf32>,
    } else {
    }
    %c0 = arith.constant 0 : index
    %c0_1 = arith.constant 0 : index
    %3 = vector.load %arg1[%c0, %c0_1] : memref<8x32xf32, #tpu.memory_space<vmem>>, vector<8x32xf32>
    %c0_2 = arith.constant 0 : index
    %c0_3 = arith.constant 0 : index
    %4 = vector.load %arg2[%c0_2, %c0_3] : memref<16x32xf32, #tpu.memory_space<vmem>>, vector<16x32xf32>
    %c0_4 = arith.constant 0 : index
    %c0_5 = arith.constant 0 : index
    %5 = vector.load %arg3[%c0_4, %c0_5] : memref<1x8xi32, #tpu.memory_space<vmem>>, vector<1x8xi32>
    %cst = arith.constant 1.000000e+00 : f32
    %6 = vector.broadcast %cst : f32 to vector<1x32xf32>
    %7 = arith.mulf %3, %3 : vector<8x32xf32>
    %cst_6 = arith.constant dense<0.000000e+00> : vector<1x8xf32>
    %8 = tpu.matmul %6, %7, %cst_6 {dimension_numbers = #tpu.dot_dimension_numbers<[1], [1], [0], [0], [0, 0, 1, 0], [], []>} : vector<1x32xf32>, vector<8x32xf32>, vector<1x8xf32> -> vector<1x8xf32>
    %cst_7 = arith.constant 1.000000e-30 : f32
    %9 = vector.broadcast %cst_7 : f32 to vector<1x8xf32>
    %10 = arith.maximumf %8, %9 : vector<1x8xf32>
    %11 = math.rsqrt %10 : vector<1x8xf32>
    %cst_8 = arith.constant dense<0.000000e+00> : vector<16x8xf32>
    %12 = tpu.matmul %4, %3, %cst_8 {dimension_numbers = #tpu.dot_dimension_numbers<[1], [1], [0], [0], [0, 0, 1, 0], [], []>} : vector<16x32xf32>, vector<8x32xf32>, vector<16x8xf32> -> vector<16x8xf32>
    %cst_9 = arith.constant 1.05263162 : f32
    %13 = vector.broadcast %cst_9 : f32 to vector<1x8xf32>
    %14 = arith.mulf %11, %13 : vector<1x8xf32>
    %15 = vector.broadcast %14 : vector<1x8xf32> to vector<16x8xf32>
    %16 = arith.mulf %12, %15 : vector<16x8xf32>
    %17 = tpu.iota {dimensions = array<i32: 0>} : vector<16x8xi32>
    %18 = vector.broadcast %5 : vector<1x8xi32> to vector<16x8xi32>
    %19 = arith.cmpi eq, %17, %18 : vector<16x8xi32>
    %cst_10 = arith.constant 0.000000e+00 : f32
    %20 = vector.broadcast %cst_10 : f32 to vector<16x8xf32>
    %21 = arith.select %19, %16, %20 : vector<16x8xi1>, vector<16x8xf32>
    %cst_11 = arith.constant dense<0.000000e+00> : vector<8xf32>
    %22 = vector.multi_reduction <add>, %21, %cst_11 [0] : vector<16x8xf32> to vector<8xf32>
    %23 = vector.shape_cast %22 : vector<8xf32> to vector<1x8xf32>
    %24 = math.exp %16 : vector<16x8xf32>
    %cst_12 = arith.constant dense<0.000000e+00> : vector<8xf32>
    %25 = vector.multi_reduction <add>, %24, %cst_12 [0] : vector<16x8xf32> to vector<8xf32>
    %26 = vector.shape_cast %25 : vector<8xf32> to vector<1x8xf32>
    %cst_13 = arith.constant 5.000000e+00 : f32
    %27 = vector.broadcast %cst_13 : f32 to vector<1x8xf32>
    %28 = arith.subf %26, %27 : vector<1x8xf32>
    %29 = math.log %28 : vector<1x8xf32>
    %30 = arith.subf %29, %23 : vector<1x8xf32>
    %31 = arith.mulf %8, %11 : vector<1x8xf32>
    %cst_14 = arith.constant 1.900000e+00 : f32
    %32 = vector.broadcast %cst_14 : f32 to vector<1x8xf32>
    %33 = arith.mulf %32, %23 : vector<1x8xf32>
    %34 = arith.mulf %33, %31 : vector<1x8xf32>
    %35 = arith.subf %8, %34 : vector<1x8xf32>
    %cst_15 = arith.constant 1.250000e-01 : f32
    %36 = vector.broadcast %cst_15 : f32 to vector<1x8xf32>
    %37 = arith.mulf %30, %36 : vector<1x8xf32>
    %cst_16 = arith.constant 3.125000e-02 : f32
    %38 = vector.broadcast %cst_16 : f32 to vector<1x8xf32>
    %39 = arith.mulf %35, %38 : vector<1x8xf32>
    %40 = arith.addf %37, %39 : vector<1x8xf32>
    %c0_17 = arith.constant 0 : index
    %c0_18 = arith.constant 0 : index
    %41 = vector.load %arg4[%c0_17, %c0_18] : memref<1x1xf32, #tpu.memory_space<vmem>>, vector<1x1xf32>
    %42 = vector.shape_cast %40 : vector<1x8xf32> to vector<1x1x8xf32>
    %cst_19 = arith.constant dense<0.000000e+00> : vector<1xf32>
    %43 = vector.multi_reduction <add>, %42, %cst_19 [1, 2] : vector<1x1x8xf32> to vector<1xf32>
    %44 = vector.shape_cast %43 : vector<1xf32> to vector<1x1x1xf32>
    %45 = vector.extract %44[0, 0, 0] : f32 from vector<1x1x1xf32>
    %46 = vector.broadcast %45 : f32 to vector<1x1xf32>
    %cst_20 = arith.constant 2.500000e-01 : f32
    %47 = vector.broadcast %cst_20 : f32 to vector<1x1xf32>
    %48 = arith.addf %46, %47 : vector<1x1xf32>
    %49 = arith.addf %41, %48 : vector<1x1xf32>
    %c0_21 = arith.constant 0 : index
    %c0_22 = arith.constant 0 : index
    %50 = vector.load %arg4[%c0_21, %c0_22] : memref<1x1xf32, #tpu.memory_space<vmem>>, vector<1x1xf32>
    tpu.vector_store %arg4[%c0_21, %c0_22], %49 {strides = array<i32>} : memref<1x1xf32, #tpu.memory_space<vmem>>, vector<1x1xf32>,
    return
  }
  func.func @transform_0(%arg0: i32) -> (i32, i32) {
    %c0_i32 = arith.constant 0 : i32
    %c0_i32_0 = arith.constant 0 : i32
    return %arg0, %c0_i32 : i32, i32
  }
  func.func @transform_1(%arg0: i32) -> (i32, i32) {
    %c0_i32 = arith.constant 0 : i32
    %c0_i32_0 = arith.constant 0 : i32
    %c0_i32_1 = arith.constant 0 : i32
    return %c0_i32, %c0_i32_0 : i32, i32
  }
  func.func @transform_2(%arg0: i32) -> (i32, i32) {
    %c0_i32 = arith.constant 0 : i32
    %c0_i32_0 = arith.constant 0 : i32
    return %c0_i32, %arg0 : i32, i32
  }
  func.func @transform_3(%arg0: i32) -> (i32, i32) {
    %c0_i32 = arith.constant 0 : i32
    %c0_i32_0 = arith.constant 0 : i32
    %c0_i32_1 = arith.constant 0 : i32
    return %c0_i32, %c0_i32_0 : i32, i32
  }
}

</mosaic_0001>

<llo_original>
// kernel: tpu_custom_call.1
$region0: #{tpu_custom_call.1}
  #allocation0 [shape = 'u32[]', space=smem, size = 0x4, offset = 0x4, fixed_abs, tag = 'smem constant byte address 0x4 - core index']
  #allocation1 [shape = 'u32[144,128]{1,0:T(1,128)}', space=vmem, size = 0x12000, scoped, tag = 'internal scratch']
  %s0 = inlined_call_operand.hbm [shape: f32[8,32], index: 0, kind: input, shape index: {}]
  %s1 = inlined_call_operand.hbm [shape: f32[16,32], index: 1, kind: input, shape index: {}]
  %s2 = inlined_call_operand.vmem [shape: s32[1,8], index: 2, kind: input, shape index: {}]
  %s3 = inlined_call_operand.hbm [shape: f32[1,1], index: 3, kind: output, shape index: {}]
  %s4 = sld [smem:[#allocation0]]
  $region34: #{tpu_custom_call.1} parent=0
    _
  %s6 = ssub.s32 1, %s4
  %s7 = scalar_select 0, %s6, %s4
  $region1: #{tpu_custom_call.1} parent=0
    #allocation2 [shape = 'u8[4096]{0}', space=vmem, size = 0x1000, scoped, tag = 'input window, operand 0, single buffered']
    #allocation3 [shape = 's32[1]{0}', space=sflag, size = 0x4, scoped, tag = 'scoped memory for tpu_custom_call.1']
    #allocation4 [shape = 's32[1]{0}', space=sflag, size = 0x4, scoped, tag = 'scoped memory for tpu_custom_call.1']
    #allocation5 [shape = 'u8[8192]{0}', space=vmem, size = 0x2000, scoped, tag = 'input window, operand 1, single buffered']
    #allocation6 [shape = 's32[1]{0}', space=sflag, size = 0x4, scoped, tag = 'scoped memory for tpu_custom_call.1']
    #allocation7 [shape = 'u8[512]{0}', space=vmem, size = 0x400, scoped, tag = 'output window, operand 0, single buffered']
    %8 = vsyncpa [#allocation3], 0
    %9 = vsyncpa [#allocation6], 0
    %10 = vsyncpa [#allocation4], 0
    // Predicated region
    $region2: #{tpu_custom_call.1} parent=1 // pred_check
      _
    $region3: #{tpu_custom_call.1} parent=1 // pred_check_branch
      %12 = sbr.rel (0) target = $region5
    $region4: #{tpu_custom_call.1} parent=1 // pred_region
      %s14 = ssub.s32 128, 128
      %15 = vsyncadd [#allocation3], %s14
      %s17 = sshll.u32 [#allocation2], 4
      %s18 = int_to_ptr.vmem [resolvable:$true] %s17
      %20 = dma.hbm_to_vmem [thread:$0]  %s0, 128, %s18, [#allocation3]
    $region5: #{tpu_custom_call.1} parent=1 // pred_fallthru
      _
    // Predicated region
    $region6: #{tpu_custom_call.1} parent=1 // pred_check
      _
    $region7: #{tpu_custom_call.1} parent=1 // pred_check_branch
      %22 = sbr.rel (0) target = $region9
    $region8: #{tpu_custom_call.1} parent=1 // pred_region
      %s24 = ssub.s32 256, 256
      %25 = vsyncadd [#allocation6], %s24
      %s26 = sshll.u32 [#allocation5], 4
      %s27 = int_to_ptr.vmem [resolvable:$true] %s26
      %32 = dma.hbm_to_vmem [thread:$0]  %s1, 256, %s27, [#allocation6], 128, 128, 8
    $region9: #{tpu_custom_call.1} parent=1 // pred_fallthru
      _
    // Predicated region
    $region10: #{tpu_custom_call.1} parent=1 // pred_check
      _
    $region11: #{tpu_custom_call.1} parent=1 // pred_check_branch
      %34 = sbr.rel (0) target = $region13
    $region12: #{tpu_custom_call.1} parent=1 // pred_region
      _
    $region13: #{tpu_custom_call.1} parent=1 // pred_fallthru
      _
    // Predicated region
    $region14: #{tpu_custom_call.1} parent=1 // pred_check
      _
    $region15: #{tpu_custom_call.1} parent=1 // pred_check_branch
      %36 = sbr.rel (0) target = $region17
    $region16: #{tpu_custom_call.1} parent=1 // pred_region
      %37 = dma.done [#allocation3], 128
    $region17: #{tpu_custom_call.1} parent=1 // pred_fallthru
      _
    // Predicated region
    $region18: #{tpu_custom_call.1} parent=1 // pred_check
      _
    $region19: #{tpu_custom_call.1} parent=1 // pred_check_branch
      %39 = sbr.rel (0) target = $region21
    $region20: #{tpu_custom_call.1} parent=1 // pred_region
      %40 = dma.done [#allocation6], 256
    $region21: #{tpu_custom_call.1} parent=1 // pred_fallthru
      _
    %p41 = scmp.eq.s32.totalorder 0, 0
    // Predicated region
    $region22: #{tpu_custom_call.1} parent=1 // pred_check
      %p42 = pneg %p41
    $region23: #{tpu_custom_call.1} parent=1 // pred_check_branch
      %44 = sbr.rel (%p42) target = $region25
    $region24: #{tpu_custom_call.1} parent=1 // pred_region
      %vm45 = vcmask 0
      %46 = vst.msk [vmem:[#allocation7] sm:$0x1] %vm45, 0.0
    $region25: #{tpu_custom_call.1} parent=1 // pred_fallthru
      _
    %v47 = vld [vmem:[#allocation2] sm:$0xff]
    %v48 = vld [vmem:[#allocation5] sm:$0xff]
    %v49 = vld [vmem:[#allocation5 + $0x8] sm:$0xff]
    %v50 = vld [vmem:[%s2] sm:$0x1]
    %v51 = vmul.f32 %v47, %v47
    %vm52 = vcmask 261120
    %v54 = vsel %vm52, 1.0, 0
    %v57 = vsel %vm52, %v51, 0
    %59 = vmatprep.subr.mxu0 0.0
    %60 = vmatpush1.xpose.msra.mxu0 %v57
    %61 = vmatprep.subr.mxu0 0.0
    %62 = vmatpush1.xpose.msra.mxu0 0.0
    %63 = vmatprep.subr.mxu0 0.0
    %64 = vmatpush1.xpose.msra.mxu0 0.0
    %65 = vmatprep.subr.mxu0 0.0
    %66 = vmatpush1.xpose.msra.mxu0 0.0
    %67 = vmatprep.subr.mxu0 0.0
    %68 = vmatpush1.xpose.msra.mxu0 0.0
    %69 = vmatprep.subr.mxu0 0.0
    %70 = vmatpush1.xpose.msra.mxu0 0.0
    %71 = vmatprep.subr.mxu0 0.0
    %72 = vmatpush1.xpose.msra.mxu0 0.0
    %73 = vmatprep.subr.mxu0 0.0
    %74 = vmatpush1.xpose.msra.mxu0 0.0
    %75 = vmatprep.subr.mxu0 0.0
    %76 = vmatpush1.xpose.msra.mxu0 0.0
    %77 = vmatprep.subr.mxu0 0.0
    %78 = vmatpush1.xpose.msra.mxu0 0.0
    %79 = vmatprep.subr.mxu0 0.0
    %80 = vmatpush1.xpose.msra.mxu0 0.0
    %81 = vmatprep.subr.mxu0 0.0
    %82 = vmatpush1.xpose.msra.mxu0 0.0
    %83 = vmatprep.subr.mxu0 0.0
    %84 = vmatpush1.xpose.msra.mxu0 0.0
    %85 = vmatprep.subr.mxu0 0.0
    %86 = vmatpush1.xpose.msra.mxu0 0.0
    %87 = vmatprep.subr.mxu0 0.0
    %88 = vmatpush1.xpose.msra.mxu0 0.0
    %89 = vmatprep.subr.mxu0 0.0
    %90 = vmatpush1.xpose.msra.mxu0 0.0
    %91 = vmatprep.subr.mxu0 0.0
    %92 = vmatpush1.xpose.msra.mxu0 0.0
    %93 = vmatprep.subr.mxu0 0.0
    %94 = vmatpush1.xpose.msra.mxu0 0.0
    %95 = vmatprep.subr.mxu0 0.0
    %96 = vmatpush1.xpose.msra.mxu0 0.0
    %97 = vmatprep.subr.mxu0 0.0
    %98 = vmatpush1.xpose.msra.mxu0 0.0
    %99 = vmatprep.subr.mxu0 0.0
    %100 = vmatpush1.xpose.msra.mxu0 0.0
    %101 = vmatprep.subr.mxu0 0.0
    %102 = vmatpush1.xpose.msra.mxu0 0.0
    %103 = vmatprep.subr.mxu0 0.0
    %104 = vmatpush1.xpose.msra.mxu0 0.0
    %105 = vmatprep.subr.mxu0 0.0
    %106 = vmatpush1.xpose.msra.mxu0 0.0
    %107 = vmatprep.subr.mxu0 0.0
    %108 = vmatpush1.xpose.msra.mxu0 0.0
    %109 = vmatprep.subr.mxu0 0.0
    %110 = vmatpush1.xpose.msra.mxu0 0.0
    %111 = vmatprep.subr.mxu0 0.0
    %112 = vmatpush1.xpose.msra.mxu0 0.0
    %113 = vmatprep.subr.mxu0 0.0
    %114 = vmatpush1.xpose.msra.mxu0 0.0
    %115 = vmatprep.subr.mxu0 0.0
    %116 = vmatpush1.xpose.msra.mxu0 0.0
    %117 = vmatprep.subr.mxu0 0.0
    %118 = vmatpush1.xpose.msra.mxu0 0.0
    %119 = vmatprep.subr.mxu0 0.0
    %120 = vmatpush1.xpose.msra.mxu0 0.0
    %121 = vmatprep.subr.mxu0 0.0
    %122 = vmatpush1.xpose.msra.mxu0 0.0
    %123 = vmatprep.mubr.f32.mxu0 0.0
    %124 = vmatmul.mubr.f32.gmra.mrb[0].mxu0 %v54
    %v125 = vpop.f32.mrb[0].mxu0
    %v126 = vadd.f32 0.0, %v125
    %v127 = vpop.f32.mrb[0].mxu0
    %128 = vdwg.mxu0
    %v129 = vmax.f32 %v126, 1e-30
    %v130 = vrsqrt.pop %v129
    %v132 = vsel %vm52, %v48, 0
    %v135 = vsel %vm52, %v49, 0
    %v138 = vsel %vm52, %v47, 0
    %140 = vmatprep.subr.mxu0 0.0
    %141 = vmatpush1.xpose.msra.mxu0 %v138
    %142 = vmatprep.subr.mxu0 0.0
    %143 = vmatpush1.xpose.msra.mxu0 0.0
    %144 = vmatprep.subr.mxu0 0.0
    %145 = vmatpush1.xpose.msra.mxu0 0.0
    %146 = vmatprep.subr.mxu0 0.0
    %147 = vmatpush1.xpose.msra.mxu0 0.0
    %148 = vmatprep.subr.mxu0 0.0
    %149 = vmatpush1.xpose.msra.mxu0 0.0
    %150 = vmatprep.subr.mxu0 0.0
    %151 = vmatpush1.xpose.msra.mxu0 0.0
    %152 = vmatprep.subr.mxu0 0.0
    %153 = vmatpush1.xpose.msra.mxu0 0.0
    %154 = vmatprep.subr.mxu0 0.0
    %155 = vmatpush1.xpose.msra.mxu0 0.0
    %156 = vmatprep.subr.mxu0 0.0
    %157 = vmatpush1.xpose.msra.mxu0 0.0
    %158 = vmatprep.subr.mxu0 0.0
    %159 = vmatpush1.xpose.msra.mxu0 0.0
    %160 = vmatprep.subr.mxu0 0.0
    %161 = vmatpush1.xpose.msra.mxu0 0.0
    %162 = vmatprep.subr.mxu0 0.0
    %163 = vmatpush1.xpose.msra.mxu0 0.0
    %164 = vmatprep.subr.mxu0 0.0
    %165 = vmatpush1.xpose.msra.mxu0 0.0
    %166 = vmatprep.subr.mxu0 0.0
    %167 = vmatpush1.xpose.msra.mxu0 0.0
    %168 = vmatprep.subr.mxu0 0.0
    %169 = vmatpush1.xpose.msra.mxu0 0.0
    %170 = vmatprep.subr.mxu0 0.0
    %171 = vmatpush1.xpose.msra.mxu0 0.0
    %172 = vmatprep.subr.mxu0 0.0
    %173 = vmatpush1.xpose.msra.mxu0 0.0
    %174 = vmatprep.subr.mxu0 0.0
    %175 = vmatpush1.xpose.msra.mxu0 0.0
    %176 = vmatprep.subr.mxu0 0.0
    %177 = vmatpush1.xpose.msra.mxu0 0.0
    %178 = vmatprep.subr.mxu0 0.0
    %179 = vmatpush1.xpose.msra.mxu0 0.0
    %180 = vmatprep.subr.mxu0 0.0
    %181 = vmatpush1.xpose.msra.mxu0 0.0
    %182 = vmatprep.subr.mxu0 0.0
    %183 = vmatpush1.xpose.msra.mxu0 0.0
    %184 = vmatprep.subr.mxu0 0.0
    %185 = vmatpush1.xpose.msra.mxu0 0.0
    %186 = vmatprep.subr.mxu0 0.0
    %187 = vmatpush1.xpose.msra.mxu0 0.0
    %188 = vmatprep.subr.mxu0 0.0
    %189 = vmatpush1.xpose.msra.mxu0 0.0
    %190 = vmatprep.subr.mxu0 0.0
    %191 = vmatpush1.xpose.msra.mxu0 0.0
    %192 = vmatprep.subr.mxu0 0.0
    %193 = vmatpush1.xpose.msra.mxu0 0.0
    %194 = vmatprep.subr.mxu0 0.0
    %195 = vmatpush1.xpose.msra.mxu0 0.0
    %196 = vmatprep.subr.mxu0 0.0
    %197 = vmatpush1.xpose.msra.mxu0 0.0
    %198 = vmatprep.subr.mxu0 0.0
    %199 = vmatpush1.xpose.msra.mxu0 0.0
    %200 = vmatprep.subr.mxu0 0.0
    %201 = vmatpush1.xpose.msra.mxu0 0.0
    %202 = vmatprep.subr.mxu0 0.0
    %203 = vmatpush1.xpose.msra.mxu0 0.0
    %204 = vmatprep.mubr.f32.mxu0 0.0
    %205 = vmatmul.mubr.f32.gmra.mrb[0].mxu0 %v132
    %v206 = vpop.f32.mrb[0].mxu0
    %v207 = vadd.f32 0.0, %v206
    %v208 = vpop.f32.mrb[0].mxu0
    %209 = vmatprep.mubr.f32.mxu0 0.0
    %210 = vmatmul.mubr.f32.gmra.mrb[0].mxu0 %v135
    %v211 = vpop.f32.mrb[0].mxu0
    %v212 = vadd.f32 0.0, %v211
    %v213 = vpop.f32.mrb[0].mxu0
    %214 = vdwg.mxu0
    %v215 = vmul.f32 %v130, 1.0526316
    %v216 = vlaneseq
    %v217 = vshrl.u32 %v216, 7
    %v218 = vsub.s32 0, %v217
    %v219 = vrot.slane %v215, %v218
    %v220 = vmul.f32 %v207, %v219
    %v221 = vmul.f32 %v212, %v219
    %v222 = vlaneseq
    %v223 = vshrl.u32 %v222, 7
    %v224 = vadd.s32 %v223, 8
    %v225 = vlaneseq
    %v226 = vshrl.u32 %v225, 7
    %v227 = vsub.s32 0, %v226
    %v228 = vrot.slane %v50, %v227
    %vm229 = vcmp.eq.s32.totalorder %v223, %v228
    %vm230 = vcmp.eq.s32.totalorder %v224, %v228
    %v231 = vsel %vm229, %v220, 0.0
    %v232 = vsel %vm230, %v221, 0.0
    %vm233 = vcmask 64512
    %v234 = vsel %vm233, %v231, 0.0
    %v235 = vsel %vm233, %v232, 0.0
    %v236 = vadd.f32 %v234, %v235
    %v237 = vrot.slane %v236, 4
    %v238 = vadd.f32 %v236, %v237
    %v239 = vrot.slane %v238, 2
    %v240 = vadd.f32 %v238, %v239
    %v241 = vrot.slane %v240, 1
    %v242 = vadd.f32 %v240, %v241
    %v243 = vmul.f32 %v220, 1.442695
    %v244 = vpow.pop %v243
    %v245 = vmul.f32 %v221, 1.442695
    %v246 = vpow.pop %v245
    %v247 = vsel %vm233, %v244, 0.0
    %v248 = vsel %vm233, %v246, 0.0
    %v249 = vadd.f32 %v247, %v248
    %v250 = vrot.slane %v249, 4
    %v251 = vadd.f32 %v249, %v250
    %v252 = vrot.slane %v251, 2
    %v253 = vadd.f32 %v251, %v252
    %v254 = vrot.slane %v253, 1
    %v255 = vadd.f32 %v253, %v254
    %v256 = vsub.f32 %v255, 5.0
    %v257 = vlog2.pop %v256
    %v258 = vmul.f32 %v257, 0.6931472
    %v259 = vsub.f32 %v258, %v242
    %v260 = vmul.f32 %v126, %v130
    %v261 = vmul.f32 %v242, 1.9
    %v262 = vmul.f32 %v261, %v260
    %v263 = vsub.f32 %v126, %v262
    %v264 = vmul.f32 %v259, 0.125
    %v265 = vmul.f32 %v263, 0.03125
    %v266 = vadd.f32 %v264, %v265
    %v267 = vld [vmem:[#allocation7] sm:$0x1]
    %vm268 = vcmask 57344
    %v269 = vsel %vm268, %v266, 0.0
    %270 = vadd.xlane.f32.xlu0 %v269
    %v271 = vpop.xlane.xlu0 %270
    %v272 = vrot.slane %v271, 4
    %v273 = vadd.f32 %v271, %v272
    %v274 = vrot.slane %v273, 2
    %v275 = vadd.f32 %v273, %v274
    %v276 = vrot.slane %v275, 1
    %v277 = vadd.f32 %v275, %v276
    %s278 = vtos %v277
    %v279 = vstv %s278
    %v280 = vadd.f32 %v279, 0.25
    %v281 = vadd.f32 %v267, %v280
    %vm282 = vcmask 0
    %283 = vst.msk [vmem:[#allocation7] sm:$0x1] %vm282, %v281
    // Predicated region
    $region26: #{tpu_custom_call.1} parent=1 // pred_check
      _
    $region27: #{tpu_custom_call.1} parent=1 // pred_check_branch
      %285 = sbr.rel (0) target = $region29
    $region28: #{tpu_custom_call.1} parent=1 // pred_region
      %s287 = ssub.s32 16, 16
      %288 = vsyncadd [#allocation4], %s287
      %s290 = sshll.u32 [#allocation7], 4
      %s291 = int_to_ptr.vmem [resolvable:$true] %s290
      %293 = dma.vmem_to_hbm [thread:$0]  %s291, 16, %s3, [#allocation4]
    $region29: #{tpu_custom_call.1} parent=1 // pred_fallthru
      _
    // Predicated region
    $region30: #{tpu_custom_call.1} parent=1 // pred_check
      _
    $region31: #{tpu_custom_call.1} parent=1 // pred_check_branch
      %295 = sbr.rel (0) target = $region33
    $region32: #{tpu_custom_call.1} parent=1 // pred_region
      %296 = dma.done [#allocation4], 16
    $region33: #{tpu_custom_call.1} parent=1 // pred_fallthru
      _
    %297 = vsyncpa [#allocation3], 1
    %298 = vsyncpa [#allocation6], 1
    %299 = vsyncpa [#allocation4], 1

</llo_original>
